<compile_context>
chip_gen: v5e
topology: v5e:2x2
jax: 0.10.0
libtpu: 0.0.40
codegen_flags: <defaults>
</compile_context>

<pallas_src>
import functools

import jax
import jax.numpy as jnp
from jax import lax
from jax.experimental import pallas as pl
from jax.experimental.pallas import tpu as pltpu


def _round_up(x, m):
    return ((x + m - 1) // m) * m


def _mlp_kernel(x_ref, w1_ref, b1_ref, w2_ref, b2_ref, w3_ref, b3_ref, o_ref):
    # x_ref: [TB, 11] (natural layout). Weights are [out, in], biases [out, 1].
    x = x_ref[...]
    nt = (((1,), (1,)), ((), ()))  # contract both operands' last axes: A @ B^T
    # Layer 1: Linear(11 -> 64) + ReLU     -> [64, TB]  (batch on lanes from here on)
    h1 = lax.dot_general(w1_ref[...], x, nt, preferred_element_type=jnp.float32)
    h1 = jnp.maximum(h1 + b1_ref[...], 0.0)
    # Layer 2: Linear(64 -> 32) + ReLU     -> [32, TB]
    h2 = jnp.dot(w2_ref[...], h1, preferred_element_type=jnp.float32)
    h2 = jnp.maximum(h2 + b2_ref[...], 0.0)
    # Layer 3: Linear(32 -> 2), no activation -> [2, TB] (lane-dense store)
    out = jnp.dot(w3_ref[...], h2, preferred_element_type=jnp.float32)
    o_ref[...] = (out + b3_ref[...]).astype(o_ref.dtype)


def _tile_b(B, block_b):
    """Batch tile size (a multiple of 128 lanes whenever tiling is needed)."""
    if B <= 128:
        return B  # single block whose dims equal the full array dims
    # >= 2 balanced tiles so dimension_semantics=("parallel",) can split the batch
    # across v7x's two TensorCores; cap at block_b to bound per-step VMEM.
    half = _round_up(-(-B // 2), 128)
    return max(128, min(block_b, half))


@functools.partial(jax.jit, static_argnames=("block_b",))
def network_forward(x, params, *, block_b=8192):
    """Forward pass of the 11->64->32->2 MLP via a single batch-tiled Pallas kernel.

    x: [B, 11] float32
    params: w1 [64,11], b1 [64,1], w2 [32,64], b2 [32,1], w3 [2,32], b3 [2,1]
            (PyTorch nn.Linear layout: weight [out, in]).
    returns: [B, 2] float32
    """
    B = x.shape[0]
    w1, b1 = params["w1"], params["b1"]
    w2, b2 = params["w2"], params["b2"]
    w3, b3 = params["w3"], params["b3"]

    TB = _tile_b(B, block_b)
    n_tiles = pl.cdiv(B, TB)

    # Weights/biases: constant index_map -> DMA'd once, resident across grid steps.
    resident = lambda a: pl.BlockSpec(a.shape, lambda i: (0,) * a.ndim)

    flops = 2 * B * (11 * 64 + 64 * 32 + 32 * 2)
    param_bytes = 4 * (64 * 11 + 64 + 32 * 64 + 32 + 2 * 32 + 2)
    cost = pl.CostEstimate(
        flops=flops,
        transcendentals=0,
        bytes_accessed=B * (11 + 2) * 4 + param_bytes,
    )

    out_t = pl.pallas_call(
        _mlp_kernel,
        out_shape=jax.ShapeDtypeStruct((2, B), jnp.float32),
        grid=(n_tiles,),
        in_specs=[
            pl.BlockSpec((TB, 11), lambda i: (i, 0)),  # x: stream natural-layout tiles
            resident(w1), resident(b1),
            resident(w2), resident(b2),
            resident(w3), resident(b3),
        ],
        out_specs=pl.BlockSpec((2, TB), lambda i: (0, i)),  # lane-dense, feature-major
        compiler_params=pltpu.CompilerParams(
            dimension_semantics=("parallel",),
            vmem_limit_bytes=32 * 1024 * 1024,
        ),
        cost_estimate=cost,
    )(x, w1, b1, w2, b2, w3, b3)

    # Only the small [2, B] result gets transposed back to PyTorch's [B, 2] layout.
    return out_t.T


def init_params(key):
    """Deterministic init mirroring PyTorch nn.Linear default (U[-1/sqrt(fan_in), ...]).

    Weights stored in PyTorch layout [out_features, in_features]; biases as [out, 1].
    """
    def linear(k, fan_in, fan_out):
        kw, kb = jax.random.split(k)
        bound = 1.0 / jnp.sqrt(fan_in)
        w = jax.random.uniform(kw, (fan_out, fan_in), jnp.float32, -bound, bound)
        b = jax.random.uniform(kb, (fan_out, 1), jnp.float32, -bound, bound)
        return w, b

    k1, k2, k3 = jax.random.split(key, 3)
    w1, b1 = linear(k1, 11, 64)
    w2, b2 = linear(k2, 64, 32)
    w3, b3 = linear(k3, 32, 2)
    return {"w1": w1, "b1": b1, "w2": w2, "b2": b2, "w3": w3, "b3": b3}


def network_forward_ref(x, params):
    """Pure-JAX reference (PyTorch semantics: x @ W^T + b)."""
    h = jnp.maximum(x @ params["w1"].T + params["b1"].T, 0.0)
    h = jnp.maximum(h @ params["w2"].T + params["b2"].T, 0.0)
    return h @ params["w3"].T + params["b3"].T


if __name__ == "__main__":
    key = jax.random.PRNGKey(0)
    kx, kp = jax.random.split(key)

    batch = 8
    x = jax.random.normal(kx, (batch, 11), jnp.float32)
    params = init_params(kp)

    out = jax.block_until_ready(network_forward(x, params))
    ref = network_forward_ref(x, params)
    assert out.shape == (batch, 2), out.shape
    assert jnp.allclose(out, ref, atol=1e-5, rtol=1e-5), "mismatch vs reference"

    # Multi-tile + ragged-last-block path (B not a multiple of the 128-lane tile):
    # exercises >=2 "parallel" grid tiles (v7x megacore) and Pallas boundary padding.
    big = 4096 + 37
    xb = jax.random.normal(kx, (big, 11), jnp.float32)
    out_b = jax.block_until_ready(network_forward(xb, params))
    ref_b = network_forward_ref(xb, params)
    assert out_b.shape == (big, 2), out_b.shape
    assert jnp.allclose(out_b, ref_b, atol=1e-4, rtol=1e-4), "mismatch (big batch)"

    print("KERNEL_OK")
</pallas_src>

<mosaic_0001>
module attributes {stable_mosaic.version = 11 : i64} {
  func.func @_mlp_kernel(%arg0: i32, %arg1: memref<8x11xf32, #tpu.memory_space<vmem>>, %arg2: memref<64x11xf32, #tpu.memory_space<vmem>>, %arg3: memref<64x1xf32, #tpu.memory_space<vmem>>, %arg4: memref<32x64xf32, #tpu.memory_space<vmem>>, %arg5: memref<32x1xf32, #tpu.memory_space<vmem>>, %arg6: memref<2x32xf32, #tpu.memory_space<vmem>>, %arg7: memref<2x1xf32, #tpu.memory_space<vmem>>, %arg8: memref<2x8xf32, #tpu.memory_space<vmem>>) attributes {dimension_semantics = [#tpu.dimension_semantics<parallel>], iteration_bounds = array<i64: 1>, scalar_prefetch = 0 : i64, scratch_operands = 0 : i64, tpu.core_type = #tpu.core_type<tc>, window_params = [{transform_indices = @transform_0, window_bounds = array<i64: 8, 11>}, {pipeline_mode = #tpu.pipeline_mode<synchronous>, transform_indices = @transform_1, window_bounds = array<i64: 64, 11>}, {pipeline_mode = #tpu.pipeline_mode<synchronous>, transform_indices = @transform_2, window_bounds = array<i64: 64, 1>}, {pipeline_mode = #tpu.pipeline_mode<synchronous>, transform_indices = @transform_3, window_bounds = array<i64: 32, 64>}, {pipeline_mode = #tpu.pipeline_mode<synchronous>, transform_indices = @transform_4, window_bounds = array<i64: 32, 1>}, {pipeline_mode = #tpu.pipeline_mode<synchronous>, transform_indices = @transform_5, window_bounds = array<i64: 2, 32>}, {pipeline_mode = #tpu.pipeline_mode<synchronous>, transform_indices = @transform_6, window_bounds = array<i64: 2, 1>}, {transform_indices = @transform_7, window_bounds = array<i64: 2, 8>}]} {
    %c0 = arith.constant 0 : index
    %c0_0 = arith.constant 0 : index
    %0 = vector.load %arg1[%c0, %c0_0] : memref<8x11xf32, #tpu.memory_space<vmem>>, vector<8x11xf32>
    %c0_1 = arith.constant 0 : index
    %c0_2 = arith.constant 0 : index
    %1 = vector.load %arg2[%c0_1, %c0_2] : memref<64x11xf32, #tpu.memory_space<vmem>>, vector<64x11xf32>
    %cst = arith.constant dense<0.000000e+00> : vector<64x8xf32>
    %2 = tpu.matmul %1, %0, %cst {dimension_numbers = #tpu.dot_dimension_numbers<[1], [1], [0], [0], [0, 0, 1, 0], [], []>} : vector<64x11xf32>, vector<8x11xf32>, vector<64x8xf32> -> vector<64x8xf32>
    %c0_3 = arith.constant 0 : index
    %c0_4 = arith.constant 0 : index
    %3 = vector.load %arg3[%c0_3, %c0_4] : memref<64x1xf32, #tpu.memory_space<vmem>>, vector<64x1xf32>
    %4 = vector.broadcast %3 : vector<64x1xf32> to vector<64x8xf32>
    %5 = arith.addf %2, %4 : vector<64x8xf32>
    %cst_5 = arith.constant 0.000000e+00 : f32
    %6 = vector.broadcast %cst_5 : f32 to vector<64x8xf32>
    %7 = arith.maximumf %5, %6 : vector<64x8xf32>
    %c0_6 = arith.constant 0 : index
    %c0_7 = arith.constant 0 : index
    %8 = vector.load %arg4[%c0_6, %c0_7] : memref<32x64xf32, #tpu.memory_space<vmem>>, vector<32x64xf32>
    %cst_8 = arith.constant dense<0.000000e+00> : vector<32x8xf32>
    %9 = tpu.matmul %8, %7, %cst_8 {dimension_numbers = #tpu.dot_dimension_numbers<[1], [0], [0], [1], [0, 0, 1, 1], [], []>} : vector<32x64xf32>, vector<64x8xf32>, vector<32x8xf32> -> vector<32x8xf32>
    %c0_9 = arith.constant 0 : index
    %c0_10 = arith.constant 0 : index
    %10 = vector.load %arg5[%c0_9, %c0_10] : memref<32x1xf32, #tpu.memory_space<vmem>>, vector<32x1xf32>
    %11 = vector.broadcast %10 : vector<32x1xf32> to vector<32x8xf32>
    %12 = arith.addf %9, %11 : vector<32x8xf32>
    %cst_11 = arith.constant 0.000000e+00 : f32
    %13 = vector.broadcast %cst_11 : f32 to vector<32x8xf32>
    %14 = arith.maximumf %12, %13 : vector<32x8xf32>
    %c0_12 = arith.constant 0 : index
    %c0_13 = arith.constant 0 : index
    %15 = vector.load %arg6[%c0_12, %c0_13] : memref<2x32xf32, #tpu.memory_space<vmem>>, vector<2x32xf32>
    %cst_14 = arith.constant dense<0.000000e+00> : vector<2x8xf32>
    %16 = tpu.matmul %15, %14, %cst_14 {dimension_numbers = #tpu.dot_dimension_numbers<[1], [0], [0], [1], [0, 0, 1, 1], [], []>} : vector<2x32xf32>, vector<32x8xf32>, vector<2x8xf32> -> vector<2x8xf32>
    %c0_15 = arith.constant 0 : index
    %c0_16 = arith.constant 0 : index
    %17 = vector.load %arg7[%c0_15, %c0_16] : memref<2x1xf32, #tpu.memory_space<vmem>>, vector<2x1xf32>
    %18 = vector.broadcast %17 : vector<2x1xf32> to vector<2x8xf32>
    %19 = arith.addf %16, %18 : vector<2x8xf32>
    %c0_17 = arith.constant 0 : index
    %c0_18 = arith.constant 0 : index
    %20 = vector.load %arg8[%c0_17, %c0_18] : memref<2x8xf32, #tpu.memory_space<vmem>>, vector<2x8xf32>
    tpu.vector_store %arg8[%c0_17, %c0_18], %19 {strides = array<i32>} : memref<2x8xf32, #tpu.memory_space<vmem>>, vector<2x8xf32>,
    return
  }
  func.func @transform_0(%arg0: i32) -> (i32, i32) {
    %c0_i32 = arith.constant 0 : i32
    %c0_i32_0 = arith.constant 0 : i32
    return %arg0, %c0_i32 : i32, i32
  }
  func.func @transform_1(%arg0: i32) -> (i32, i32) {
    %c0_i32 = arith.constant 0 : i32
    %c0_i32_0 = arith.constant 0 : i32
    %c0_i32_1 = arith.constant 0 : i32
    return %c0_i32, %c0_i32_0 : i32, i32
  }
  func.func @transform_2(%arg0: i32) -> (i32, i32) {
    %c0_i32 = arith.constant 0 : i32
    %c0_i32_0 = arith.constant 0 : i32
    %c0_i32_1 = arith.constant 0 : i32
    return %c0_i32, %c0_i32_0 : i32, i32
  }
  func.func @transform_3(%arg0: i32) -> (i32, i32) {
    %c0_i32 = arith.constant 0 : i32
    %c0_i32_0 = arith.constant 0 : i32
    %c0_i32_1 = arith.constant 0 : i32
    return %c0_i32, %c0_i32_0 : i32, i32
  }
  func.func @transform_4(%arg0: i32) -> (i32, i32) {
    %c0_i32 = arith.constant 0 : i32
    %c0_i32_0 = arith.constant 0 : i32
    %c0_i32_1 = arith.constant 0 : i32
    return %c0_i32, %c0_i32_0 : i32, i32
  }
  func.func @transform_5(%arg0: i32) -> (i32, i32) {
    %c0_i32 = arith.constant 0 : i32
    %c0_i32_0 = arith.constant 0 : i32
    %c0_i32_1 = arith.constant 0 : i32
    return %c0_i32, %c0_i32_0 : i32, i32
  }
  func.func @transform_6(%arg0: i32) -> (i32, i32) {
    %c0_i32 = arith.constant 0 : i32
    %c0_i32_0 = arith.constant 0 : i32
    %c0_i32_1 = arith.constant 0 : i32
    return %c0_i32, %c0_i32_0 : i32, i32
  }
  func.func @transform_7(%arg0: i32) -> (i32, i32) {
    %c0_i32 = arith.constant 0 : i32
    %c0_i32_0 = arith.constant 0 : i32
    return %c0_i32, %arg0 : i32, i32
  }
}

</mosaic_0001>

<llo_original>
// kernel: network_forward.1
$region0: #{network_forward.1}
  #allocation0 [shape = 'u32[]', space=smem, size = 0x4, offset = 0x4, fixed_abs, tag = 'smem constant byte address 0x4 - core index']
  #allocation1 [shape = 'u32[72,128]{1,0:T(1,128)}', space=vmem, size = 0x9000, scoped, tag = 'internal scratch']
  %s0 = inlined_call_operand.vmem [shape: f32[8,11], index: 0, kind: input, shape index: {}]
  %s1 = inlined_call_operand.vmem [shape: f32[64,11], index: 1, kind: input, shape index: {}]
  %s2 = inlined_call_operand.vmem [shape: f32[64,1], index: 2, kind: input, shape index: {}]
  %s3 = inlined_call_operand.vmem [shape: f32[32,64], index: 3, kind: input, shape index: {}]
  %s4 = inlined_call_operand.vmem [shape: f32[32,1], index: 4, kind: input, shape index: {}]
  %s5 = inlined_call_operand.vmem [shape: f32[2,32], index: 5, kind: input, shape index: {}]
  %s6 = inlined_call_operand.vmem [shape: f32[2,1], index: 6, kind: input, shape index: {}]
  %s7 = inlined_call_operand.hbm [shape: f32[2,8], index: 7, kind: output, shape index: {}]
  %s8 = sld [smem:[#allocation0]]
  $region38: #{network_forward.1} parent=0
    _
  %s10 = ssub.s32 1, %s8
  %s11 = scalar_select 0, %s10, %s8
  $region1: #{network_forward.1} parent=0
    #allocation2 [shape = 'u8[1024]{0}', space=vmem, size = 0x400, scoped, tag = 'output window, operand 0, single buffered']
    #allocation3 [shape = 's32[1]{0}', space=sflag, size = 0x4, scoped, tag = 'scoped memory for network_forward.1']
    %12 = vsyncpa [#allocation3], 0
    // Predicated region
    $region2: #{network_forward.1} parent=1 // pred_check
      _
    $region3: #{network_forward.1} parent=1 // pred_check_branch
      %14 = sbr.rel (0) target = $region5
    $region4: #{network_forward.1} parent=1 // pred_region
      _
    $region5: #{network_forward.1} parent=1 // pred_fallthru
      _
    // Predicated region
    $region6: #{network_forward.1} parent=1 // pred_check
      _
    $region7: #{network_forward.1} parent=1 // pred_check_branch
      %16 = sbr.rel (0) target = $region9
    $region8: #{network_forward.1} parent=1 // pred_region
      _
    $region9: #{network_forward.1} parent=1 // pred_fallthru
      _
    // Predicated region
    $region10: #{network_forward.1} parent=1 // pred_check
      _
    $region11: #{network_forward.1} parent=1 // pred_check_branch
      %18 = sbr.rel (0) target = $region13
    $region12: #{network_forward.1} parent=1 // pred_region
      _
    $region13: #{network_forward.1} parent=1 // pred_fallthru
      _
    // Predicated region
    $region14: #{network_forward.1} parent=1 // pred_check
      _
    $region15: #{network_forward.1} parent=1 // pred_check_branch
      %20 = sbr.rel (0) target = $region17
    $region16: #{network_forward.1} parent=1 // pred_region
      _
    $region17: #{network_forward.1} parent=1 // pred_fallthru
      _
    // Predicated region
    $region18: #{network_forward.1} parent=1 // pred_check
      _
    $region19: #{network_forward.1} parent=1 // pred_check_branch
      %22 = sbr.rel (0) target = $region21
    $region20: #{network_forward.1} parent=1 // pred_region
      _
    $region21: #{network_forward.1} parent=1 // pred_fallthru
      _
    // Predicated region
    $region22: #{network_forward.1} parent=1 // pred_check
      _
    $region23: #{network_forward.1} parent=1 // pred_check_branch
      %24 = sbr.rel (0) target = $region25
    $region24: #{network_forward.1} parent=1 // pred_region
      _
    $region25: #{network_forward.1} parent=1 // pred_fallthru
      _
    // Predicated region
    $region26: #{network_forward.1} parent=1 // pred_check
      _
    $region27: #{network_forward.1} parent=1 // pred_check_branch
      %26 = sbr.rel (0) target = $region29
    $region28: #{network_forward.1} parent=1 // pred_region
      _
    $region29: #{network_forward.1} parent=1 // pred_fallthru
      _
    %v27 = vld [vmem:[%s0] sm:$0xff]
    %v28 = vld [vmem:[%s1] sm:$0xff]
    %v29 = vld [vmem:[%s1 + $0x8] sm:$0xff]
    %v30 = vld [vmem:[%s1 + $0x10] sm:$0xff]
    %v31 = vld [vmem:[%s1 + $0x18] sm:$0xff]
    %v32 = vld [vmem:[%s1 + $0x20] sm:$0xff]
    %v33 = vld [vmem:[%s1 + $0x28] sm:$0xff]
    %v34 = vld [vmem:[%s1 + $0x30] sm:$0xff]
    %v35 = vld [vmem:[%s1 + $0x38] sm:$0xff]
    %v36 = vld [vmem:[%s2] sm:$0xff]
    %v37 = vld [vmem:[%s2 + $0x8] sm:$0xff]
    %v38 = vld [vmem:[%s2 + $0x10] sm:$0xff]
    %v39 = vld [vmem:[%s2 + $0x18] sm:$0xff]
    %v40 = vld [vmem:[%s2 + $0x20] sm:$0xff]
    %v41 = vld [vmem:[%s2 + $0x28] sm:$0xff]
    %v42 = vld [vmem:[%s2 + $0x30] sm:$0xff]
    %v43 = vld [vmem:[%s2 + $0x38] sm:$0xff]
    %45 = vset.pattern.permute.xlu0 0
    %46 = vperm.xlu0 %45, %v36
    %v47 = vpop.permute.xlu0 %46
    %50 = vset.pattern.permute.xlu0 0
    %51 = vperm.xlu0 %50, %v37
    %v52 = vpop.permute.xlu0 %51
    %55 = vset.pattern.permute.xlu0 0
    %56 = vperm.xlu0 %55, %v38
    %v57 = vpop.permute.xlu0 %56
    %60 = vset.pattern.permute.xlu0 0
    %61 = vperm.xlu0 %60, %v39
    %v62 = vpop.permute.xlu0 %61
    %65 = vset.pattern.permute.xlu0 0
    %66 = vperm.xlu0 %65, %v40
    %v67 = vpop.permute.xlu0 %66
    %70 = vset.pattern.permute.xlu0 0
    %71 = vperm.xlu0 %70, %v41
    %v72 = vpop.permute.xlu0 %71
    %75 = vset.pattern.permute.xlu0 0
    %76 = vperm.xlu0 %75, %v42
    %v77 = vpop.permute.xlu0 %76
    %80 = vset.pattern.permute.xlu0 0
    %81 = vperm.xlu0 %80, %v43
    %v82 = vpop.permute.xlu0 %81
    %vm84 = vcmask 89088
    %v86 = vsel %vm84, %v28, 0
    %v89 = vsel %vm84, %v29, 0
    %v92 = vsel %vm84, %v30, 0
    %v95 = vsel %vm84, %v31, 0
    %v98 = vsel %vm84, %v32, 0
    %v101 = vsel %vm84, %v33, 0
    %v104 = vsel %vm84, %v34, 0
    %v107 = vsel %vm84, %v35, 0
    %v110 = vsel %vm84, %v27, 0
    %112 = vmatpush.xpose.msra.mxu0 0.0
    %113 = vmatpush.xpose.msra.mxu0 0.0
    %114 = vmatpush.xpose.msra.mxu0 0.0
    %115 = vmatpush.xpose.msra.mxu0 0.0
    %116 = vmatpush.xpose.msra.mxu0 0.0
    %117 = vmatpush.xpose.msra.mxu0 0.0
    %118 = vmatpush.xpose.msra.mxu0 0.0
    %119 = vmatpush.xpose.msra.mxu0 0.0
    %120 = vmatpush.xpose.msra.mxu0 0.0
    %121 = vmatpush.xpose.msra.mxu0 0.0
    %122 = vmatpush.xpose.msra.mxu0 0.0
    %123 = vmatpush.xpose.msra.mxu0 0.0
    %124 = vmatpush.xpose.msra.mxu0 0.0
    %125 = vmatpush.xpose.msra.mxu0 0.0
    %126 = vmatpush.xpose.msra.mxu0 0.0
    %127 = vmatpush.xpose.msra.mxu0 %v110
    %128 = vmatmul.f32.gmra.mxu0 %v86
    %v129 = vpop.f32.mrf.mxu0
    %v130 = vadd.f32 %v47, %v129
    %131 = vmatmul.f32.gmra.mxu0 %v89
    %v132 = vpop.f32.mrf.mxu0
    %v133 = vadd.f32 %v52, %v132
    %134 = vmatmul.f32.gmra.mxu0 %v92
    %v135 = vpop.f32.mrf.mxu0
    %v136 = vadd.f32 %v57, %v135
    %137 = vmatmul.f32.gmra.mxu0 %v95
    %v138 = vpop.f32.mrf.mxu0
    %v139 = vadd.f32 %v62, %v138
    %140 = vmatmul.f32.gmra.mxu0 %v98
    %v141 = vpop.f32.mrf.mxu0
    %v142 = vadd.f32 %v67, %v141
    %143 = vmatmul.f32.gmra.mxu0 %v101
    %v144 = vpop.f32.mrf.mxu0
    %v145 = vadd.f32 %v72, %v144
    %146 = vmatmul.f32.gmra.mxu0 %v104
    %v147 = vpop.f32.mrf.mxu0
    %v148 = vadd.f32 %v77, %v147
    %149 = vmatmul.f32.gmra.mxu0 %v107
    %v150 = vpop.f32.mrf.mxu0
    %v151 = vadd.f32 %v82, %v150
    %152 = vdwg.mxu0
    %v153 = vmax.f32 %v130, 0.0
    %v154 = vmax.f32 %v133, 0.0
    %v155 = vmax.f32 %v136, 0.0
    %v156 = vmax.f32 %v139, 0.0
    %v157 = vmax.f32 %v142, 0.0
    %v158 = vmax.f32 %v145, 0.0
    %v159 = vmax.f32 %v148, 0.0
    %v160 = vmax.f32 %v151, 0.0
    %v161 = vld [vmem:[%s3] sm:$0xff]
    %v162 = vld [vmem:[%s3 + $0x8] sm:$0xff]
    %v163 = vld [vmem:[%s3 + $0x10] sm:$0xff]
    %v164 = vld [vmem:[%s3 + $0x18] sm:$0xff]
    %v165 = vld [vmem:[%s4] sm:$0xff]
    %v166 = vld [vmem:[%s4 + $0x8] sm:$0xff]
    %v167 = vld [vmem:[%s4 + $0x10] sm:$0xff]
    %v168 = vld [vmem:[%s4 + $0x18] sm:$0xff]
    %170 = vset.pattern.permute.xlu0 0
    %171 = vperm.xlu0 %170, %v165
    %v172 = vpop.permute.xlu0 %171
    %175 = vset.pattern.permute.xlu0 0
    %176 = vperm.xlu0 %175, %v166
    %v177 = vpop.permute.xlu0 %176
    %180 = vset.pattern.permute.xlu0 0
    %181 = vperm.xlu0 %180, %v167
    %v182 = vpop.permute.xlu0 %181
    %185 = vset.pattern.permute.xlu0 0
    %186 = vperm.xlu0 %185, %v168
    %v187 = vpop.permute.xlu0 %186
    %vm189 = vcmask 523264
    %v191 = vsel %vm189, %v161, 0
    %v194 = vsel %vm189, %v162, 0
    %v197 = vsel %vm189, %v163, 0
    %v200 = vsel %vm189, %v164, 0
    %202 = vmatpush.msra.mxu0 0.0
    %203 = vmatpush.msra.mxu0 0.0
    %204 = vmatpush.msra.mxu0 0.0
    %205 = vmatpush.msra.mxu0 0.0
    %206 = vmatpush.msra.mxu0 0.0
    %207 = vmatpush.msra.mxu0 0.0
    %208 = vmatpush.msra.mxu0 0.0
    %209 = vmatpush.msra.mxu0 0.0
    %210 = vmatpush.msra.mxu0 %v160
    %211 = vmatpush.msra.mxu0 %v159
    %212 = vmatpush.msra.mxu0 %v158
    %213 = vmatpush.msra.mxu0 %v157
    %214 = vmatpush.msra.mxu0 %v156
    %215 = vmatpush.msra.mxu0 %v155
    %216 = vmatpush.msra.mxu0 %v154
    %217 = vmatpush.msra.mxu0 %v153
    %218 = vmatmul.f32.gmra.mxu0 %v191
    %v219 = vpop.f32.mrf.mxu0
    %v220 = vadd.f32 %v172, %v219
    %221 = vmatmul.f32.gmra.mxu0 %v194
    %v222 = vpop.f32.mrf.mxu0
    %v223 = vadd.f32 %v177, %v222
    %224 = vmatmul.f32.gmra.mxu0 %v197
    %v225 = vpop.f32.mrf.mxu0
    %v226 = vadd.f32 %v182, %v225
    %227 = vmatmul.f32.gmra.mxu0 %v200
    %v228 = vpop.f32.mrf.mxu0
    %v229 = vadd.f32 %v187, %v228
    %230 = vdwg.mxu0
    %v231 = vmax.f32 %v220, 0.0
    %v232 = vmax.f32 %v223, 0.0
    %v233 = vmax.f32 %v226, 0.0
    %v234 = vmax.f32 %v229, 0.0
    %v235 = vld [vmem:[%s5] sm:$0x3]
    %v236 = vld [vmem:[%s6] sm:$0x3]
    %238 = vset.pattern.permute.xlu0 0
    %239 = vperm.xlu0 %238, %v236
    %v240 = vpop.permute.xlu0 %239
    %vm242 = vcmask 261120
    %v244 = vsel %vm242, %v235, 0
    %246 = vmatpush.msra.mxu0 0.0
    %247 = vmatpush.msra.mxu0 0.0
    %248 = vmatpush.msra.mxu0 0.0
    %249 = vmatpush.msra.mxu0 0.0
    %250 = vmatpush.msra.mxu0 0.0
    %251 = vmatpush.msra.mxu0 0.0
    %252 = vmatpush.msra.mxu0 0.0
    %253 = vmatpush.msra.mxu0 0.0
    %254 = vmatpush.msra.mxu0 0.0
    %255 = vmatpush.msra.mxu0 0.0
    %256 = vmatpush.msra.mxu0 0.0
    %257 = vmatpush.msra.mxu0 0.0
    %258 = vmatpush.msra.mxu0 %v234
    %259 = vmatpush.msra.mxu0 %v233
    %260 = vmatpush.msra.mxu0 %v232
    %261 = vmatpush.msra.mxu0 %v231
    %262 = vmatmul.f32.gmra.mxu0 %v244
    %v263 = vpop.f32.mrf.mxu0
    %v264 = vadd.f32 %v240, %v263
    %265 = vdwg.mxu0
    %vm266 = vcmask 58368
    %267 = vst.msk [vmem:[#allocation2] sm:$0x3] %vm266, %v264
    // Predicated region
    $region30: #{network_forward.1} parent=1 // pred_check
      _
    $region31: #{network_forward.1} parent=1 // pred_check_branch
      %269 = sbr.rel (0) target = $region33
    $region32: #{network_forward.1} parent=1 // pred_region
      %271 = vsyncadd [#allocation3], 0
      %s273 = sshll.u32 [#allocation2], 4
      %s274 = int_to_ptr.vmem [resolvable:$true] %s273
      %s275 = sshll.u32 %s7, 4
      %s276 = int_to_ptr.hbm [resolvable:$true] %s275
      %278 = dma.vmem_to_hbm [thread:$0]  %s274, 32, %s276, [#allocation3]
    $region33: #{network_forward.1} parent=1 // pred_fallthru
      _
    // Predicated region
    $region34: #{network_forward.1} parent=1 // pred_check
      _
    $region35: #{network_forward.1} parent=1 // pred_check_branch
      %280 = sbr.rel (0) target = $region37
    $region36: #{network_forward.1} parent=1 // pred_region
      %282 = dma.done [#allocation3], 32
    $region37: #{network_forward.1} parent=1 // pred_fallthru
      _
    %283 = vsyncpa [#allocation3], 1

</llo_original>
